<compile_context>
chip_gen: v7x
topology: tpu7x:2x2x1
jax: 0.10.0
libtpu: 0.0.40
codegen_flags: <defaults>
</compile_context>

<pallas_src>
import jax
import jax.numpy as jnp
from jax.experimental import pallas as pl
from jax.experimental.pallas import tpu as pltpu


def _round_up(n, m):
    return ((n + m - 1) // m) * m


def mlp_kernel(x_ref, w1_ref, b1_ref, w2_ref, b2_ref, w3_ref, b3_ref, out_ref):
    # x arrives as f32; cast to the (pre-cast) weight dtype inside the kernel so the
    # wrapper never runs a separate pad/cast pass over x in HBM.
    x = x_ref[...].astype(w1_ref.dtype)                   # (TB, D)

    # Layer 1: Linear(D, 256) + ReLU (f32 accumulation, f32 bias, f32 ReLU)
    h1 = jnp.dot(x, w1_ref[...], preferred_element_type=jnp.float32) + b1_ref[...]
    h1 = jnp.maximum(h1, 0.0).astype(w2_ref.dtype)

    # Dropout(0.3) -> identity (eval mode)

    # Layer 2: Linear(256, 128) + ReLU
    h2 = jnp.dot(h1, w2_ref[...], preferred_element_type=jnp.float32) + b2_ref[...]
    h2 = jnp.maximum(h2, 0.0).astype(w3_ref.dtype)

    # Layer 3: Linear(128, C_pad)  (lane-dense padded output)
    out = jnp.dot(h2, w3_ref[...], preferred_element_type=jnp.float32) + b3_ref[...]
    out_ref[...] = out.astype(out_ref.dtype)


def prepare_params(params, compute_dtype=jnp.bfloat16):
    """One-time pad (C -> multiple of 128) + cast of weights/biases (hoisted off the
    per-forward path). Weights stored transposed: (in, out)."""
    C = params["w3"].shape[1]
    C_pad = _round_up(C, 128)
    return {
        "w1": params["w1"].astype(compute_dtype),
        "b1": params["b1"].astype(jnp.float32),
        "w2": params["w2"].astype(compute_dtype),
        "b2": params["b2"].astype(jnp.float32),
        "w3": jnp.pad(params["w3"], ((0, 0), (0, C_pad - C))).astype(compute_dtype),
        "b3": jnp.pad(params["b3"], ((0, 0), (0, C_pad - C))).astype(jnp.float32),
        "num_classes": C,
    }


def mlp_classifier_forward(x, prepared, *, tile_b=2048, out_dtype=None):
    """x: (B, D) float32 (passed to the kernel as-is, no pad/cast pass).
    prepared: output of prepare_params(). Returns (B, num_classes) logits."""
    B, D = x.shape
    w1, b1 = prepared["w1"], prepared["b1"]
    w2, b2 = prepared["w2"], prepared["b2"]
    w3, b3 = prepared["w3"], prepared["b3"]
    C = prepared["num_classes"]
    H1, H2, C_pad = w1.shape[1], w2.shape[1], w3.shape[1]

    compute_dtype = w1.dtype
    if out_dtype is None:
        # bf16 logits on the fast path halve the dominant (padded) output HBM stream.
        out_dtype = compute_dtype

    # ---- Batch tiling (no batch padding; Pallas masks the ragged last block) ----
    tile_mult = 16  # bf16 packs two rows per sublane; multiple of 16 avoids masked layouts
    tile_b_eff = max(tile_mult, min(_round_up(tile_b, tile_mult), _round_up(B, tile_mult)))
    # v7x: make sure the grid has >= 2 steps so ("parallel",) uses both TensorCores
    # (costs only one extra ~0.35us step on single-TC v5e/v6e, so apply unconditionally
    # once the batch is large enough for two big tiles).
    if B >= 2048:
        tile_b_eff = min(tile_b_eff, _round_up(pl.cdiv(B, 2), tile_mult))
    grid = (pl.cdiv(B, tile_b_eff),)

    flops = 2 * B * (D * H1 + H1 * H2 + H2 * C_pad)
    bytes_accessed = (
        x.size * x.dtype.itemsize
        + sum(a.size * a.dtype.itemsize for a in (w1, b1, w2, b2, w3, b3))
        + B * C_pad * jnp.dtype(out_dtype).itemsize
    )

    out_padded = pl.pallas_call(
        mlp_kernel,
        out_shape=jax.ShapeDtypeStruct((B, C_pad), out_dtype),
        grid_spec=pltpu.PrefetchScalarGridSpec(
            num_scalar_prefetch=0,
            grid=grid,
            in_specs=[
                pl.BlockSpec((tile_b_eff, D), lambda i: (i, 0)),  # x tile (last dim = full D)
                pl.BlockSpec((D, H1), lambda i: (0, 0)),          # W1 (grid-invariant)
                pl.BlockSpec((1, H1), lambda i: (0, 0)),          # b1
                pl.BlockSpec((H1, H2), lambda i: (0, 0)),         # W2
                pl.BlockSpec((1, H2), lambda i: (0, 0)),          # b2
                pl.BlockSpec((H2, C_pad), lambda i: (0, 0)),      # W3 (C padded to 128)
                pl.BlockSpec((1, C_pad), lambda i: (0, 0)),       # b3 (padded)
            ],
            out_specs=pl.BlockSpec((tile_b_eff, C_pad), lambda i: (i, 0)),
        ),
        compiler_params=pltpu.CompilerParams(
            dimension_semantics=("parallel",),
            vmem_limit_bytes=32 * 1024 * 1024,  # ~8 MB used at tile 2048; safe on v7x's 64 MiB
        ),
        cost_estimate=pl.CostEstimate(
            flops=flops, transcendentals=0, bytes_accessed=bytes_accessed
        ),
    )(x, w1, b1, w2, b2, w3, b3)

    # Trailing slice over the (cheap, bf16) padded buffer; ideally fused into the consumer.
    return out_padded[:, :C]


def init_params(key, input_dim, num_classes):
    """Deterministic init. Weights stored transposed: (in, out)."""
    k1, k2, k3, k4, k5, k6 = jax.random.split(key, 6)

    def uniform(k, shape, fan_in):
        bound = 1.0 / jnp.sqrt(fan_in)
        return jax.random.uniform(k, shape, jnp.float32, -bound, bound)

    return {
        "w1": uniform(k1, (input_dim, 256), input_dim),
        "b1": uniform(k2, (1, 256), input_dim),
        "w2": uniform(k3, (256, 128), 256),
        "b2": uniform(k4, (1, 128), 256),
        "w3": uniform(k5, (128, num_classes), 128),
        "b3": uniform(k6, (1, num_classes), 128),
    }


if __name__ == "__main__":
    INPUT_DIM = 64
    NUM_CLASSES = 10
    BATCH = 16

    key = jax.random.PRNGKey(0)
    kx, kp = jax.random.split(key)
    x = jax.random.normal(kx, (BATCH, INPUT_DIM), dtype=jnp.float32)
    params = init_params(kp, INPUT_DIM, NUM_CLASSES)

    # Pure-JAX reference (eval-mode forward, f32)
    h1 = jnp.maximum(x @ params["w1"] + params["b1"], 0.0)
    h2 = jnp.maximum(h1 @ params["w2"] + params["b2"], 0.0)
    ref = h2 @ params["w3"] + params["b3"]

    # Exact path: f32 compute, f32 output
    prepared_f32 = prepare_params(params, compute_dtype=jnp.float32)
    out_f32 = mlp_classifier_forward(x, prepared_f32)
    out_f32 = jax.block_until_ready(out_f32)
    assert out_f32.shape == (BATCH, NUM_CLASSES)
    assert out_f32.dtype == jnp.float32
    assert jnp.allclose(out_f32, ref, atol=1e-5, rtol=1e-5)

    # Fast path: bf16 compute + bf16 logits (looser tolerance)
    prepared_bf16 = prepare_params(params, compute_dtype=jnp.bfloat16)
    out_bf16 = mlp_classifier_forward(x, prepared_bf16)
    out_bf16 = jax.block_until_ready(out_bf16)
    assert out_bf16.shape == (BATCH, NUM_CLASSES)
    assert out_bf16.dtype == jnp.bfloat16
    assert jnp.allclose(out_bf16.astype(jnp.float32), ref, atol=7.5e-2, rtol=5e-2)

    print("KERNEL_OK")
</pallas_src>

<mosaic_0001>
module attributes {stable_mosaic.version = 11 : i64} {
  func.func @mlp_kernel(%arg0: i32, %arg1: memref<16x64xf32, #tpu.memory_space<vmem>>, %arg2: memref<64x256xf32, #tpu.memory_space<vmem>>, %arg3: memref<1x256xf32, #tpu.memory_space<vmem>>, %arg4: memref<256x128xf32, #tpu.memory_space<vmem>>, %arg5: memref<1x128xf32, #tpu.memory_space<vmem>>, %arg6: memref<128x128xf32, #tpu.memory_space<vmem>>, %arg7: memref<1x128xf32, #tpu.memory_space<vmem>>, %arg8: memref<16x128xf32, #tpu.memory_space<vmem>>) attributes {dimension_semantics = [#tpu.dimension_semantics<parallel>], iteration_bounds = array<i64: 1>, scalar_prefetch = 0 : i64, scratch_operands = 0 : i64, tpu.core_type = #tpu.core_type<tc>, window_params = [{transform_indices = @transform_0, window_bounds = array<i64: 16, 64>}, {pipeline_mode = #tpu.pipeline_mode<synchronous>, transform_indices = @transform_1, window_bounds = array<i64: 64, 256>}, {pipeline_mode = #tpu.pipeline_mode<synchronous>, transform_indices = @transform_2, window_bounds = array<i64: 1, 256>}, {pipeline_mode = #tpu.pipeline_mode<synchronous>, transform_indices = @transform_3, window_bounds = array<i64: 256, 128>}, {pipeline_mode = #tpu.pipeline_mode<synchronous>, transform_indices = @transform_4, window_bounds = array<i64: 1, 128>}, {pipeline_mode = #tpu.pipeline_mode<synchronous>, transform_indices = @transform_5, window_bounds = array<i64: 128, 128>}, {pipeline_mode = #tpu.pipeline_mode<synchronous>, transform_indices = @transform_6, window_bounds = array<i64: 1, 128>}, {transform_indices = @transform_7, window_bounds = array<i64: 16, 128>}]} {
    %c0 = arith.constant 0 : index
    %c0_0 = arith.constant 0 : index
    %0 = vector.load %arg1[%c0, %c0_0] : memref<16x64xf32, #tpu.memory_space<vmem>>, vector<16x64xf32>
    %c0_1 = arith.constant 0 : index
    %c0_2 = arith.constant 0 : index
    %1 = vector.load %arg2[%c0_1, %c0_2] : memref<64x256xf32, #tpu.memory_space<vmem>>, vector<64x256xf32>
    %cst = arith.constant dense<0.000000e+00> : vector<16x256xf32>
    %2 = tpu.matmul %0, %1, %cst {dimension_numbers = #tpu.dot_dimension_numbers<[1], [0], [0], [1], [0, 0, 1, 1], [], []>} : vector<16x64xf32>, vector<64x256xf32>, vector<16x256xf32> -> vector<16x256xf32>
    %c0_3 = arith.constant 0 : index
    %c0_4 = arith.constant 0 : index
    %3 = vector.load %arg3[%c0_3, %c0_4] : memref<1x256xf32, #tpu.memory_space<vmem>>, vector<1x256xf32>
    %4 = vector.broadcast %3 : vector<1x256xf32> to vector<16x256xf32>
    %5 = arith.addf %2, %4 : vector<16x256xf32>
    %cst_5 = arith.constant 0.000000e+00 : f32
    %6 = vector.broadcast %cst_5 : f32 to vector<16x256xf32>
    %7 = arith.maximumf %5, %6 : vector<16x256xf32>
    %c0_6 = arith.constant 0 : index
    %c0_7 = arith.constant 0 : index
    %8 = vector.load %arg4[%c0_6, %c0_7] : memref<256x128xf32, #tpu.memory_space<vmem>>, vector<256x128xf32>
    %cst_8 = arith.constant dense<0.000000e+00> : vector<16x128xf32>
    %9 = tpu.matmul %7, %8, %cst_8 {dimension_numbers = #tpu.dot_dimension_numbers<[1], [0], [0], [1], [0, 0, 1, 1], [], []>} : vector<16x256xf32>, vector<256x128xf32>, vector<16x128xf32> -> vector<16x128xf32>
    %c0_9 = arith.constant 0 : index
    %c0_10 = arith.constant 0 : index
    %10 = vector.load %arg5[%c0_9, %c0_10] : memref<1x128xf32, #tpu.memory_space<vmem>>, vector<1x128xf32>
    %11 = vector.broadcast %10 : vector<1x128xf32> to vector<16x128xf32>
    %12 = arith.addf %9, %11 : vector<16x128xf32>
    %cst_11 = arith.constant 0.000000e+00 : f32
    %13 = vector.broadcast %cst_11 : f32 to vector<16x128xf32>
    %14 = arith.maximumf %12, %13 : vector<16x128xf32>
    %c0_12 = arith.constant 0 : index
    %c0_13 = arith.constant 0 : index
    %15 = vector.load %arg6[%c0_12, %c0_13] : memref<128x128xf32, #tpu.memory_space<vmem>>, vector<128x128xf32>
    %cst_14 = arith.constant dense<0.000000e+00> : vector<16x128xf32>
    %16 = tpu.matmul %14, %15, %cst_14 {dimension_numbers = #tpu.dot_dimension_numbers<[1], [0], [0], [1], [0, 0, 1, 1], [], []>} : vector<16x128xf32>, vector<128x128xf32>, vector<16x128xf32> -> vector<16x128xf32>
    %c0_15 = arith.constant 0 : index
    %c0_16 = arith.constant 0 : index
    %17 = vector.load %arg7[%c0_15, %c0_16] : memref<1x128xf32, #tpu.memory_space<vmem>>, vector<1x128xf32>
    %18 = vector.broadcast %17 : vector<1x128xf32> to vector<16x128xf32>
    %19 = arith.addf %16, %18 : vector<16x128xf32>
    %c0_17 = arith.constant 0 : index
    %c0_18 = arith.constant 0 : index
    %20 = vector.load %arg8[%c0_17, %c0_18] : memref<16x128xf32, #tpu.memory_space<vmem>>, vector<16x128xf32>
    tpu.vector_store %arg8[%c0_17, %c0_18], %19 {strides = array<i32>} : memref<16x128xf32, #tpu.memory_space<vmem>>, vector<16x128xf32>,
    return
  }
  func.func @transform_0(%arg0: i32) -> (i32, i32) {
    %c0_i32 = arith.constant 0 : i32
    %c0_i32_0 = arith.constant 0 : i32
    return %arg0, %c0_i32 : i32, i32
  }
  func.func @transform_1(%arg0: i32) -> (i32, i32) {
    %c0_i32 = arith.constant 0 : i32
    %c0_i32_0 = arith.constant 0 : i32
    %c0_i32_1 = arith.constant 0 : i32
    return %c0_i32, %c0_i32_0 : i32, i32
  }
  func.func @transform_2(%arg0: i32) -> (i32, i32) {
    %c0_i32 = arith.constant 0 : i32
    %c0_i32_0 = arith.constant 0 : i32
    %c0_i32_1 = arith.constant 0 : i32
    return %c0_i32, %c0_i32_0 : i32, i32
  }
  func.func @transform_3(%arg0: i32) -> (i32, i32) {
    %c0_i32 = arith.constant 0 : i32
    %c0_i32_0 = arith.constant 0 : i32
    %c0_i32_1 = arith.constant 0 : i32
    return %c0_i32, %c0_i32_0 : i32, i32
  }
  func.func @transform_4(%arg0: i32) -> (i32, i32) {
    %c0_i32 = arith.constant 0 : i32
    %c0_i32_0 = arith.constant 0 : i32
    %c0_i32_1 = arith.constant 0 : i32
    return %c0_i32, %c0_i32_0 : i32, i32
  }
  func.func @transform_5(%arg0: i32) -> (i32, i32) {
    %c0_i32 = arith.constant 0 : i32
    %c0_i32_0 = arith.constant 0 : i32
    %c0_i32_1 = arith.constant 0 : i32
    return %c0_i32, %c0_i32_0 : i32, i32
  }
  func.func @transform_6(%arg0: i32) -> (i32, i32) {
    %c0_i32 = arith.constant 0 : i32
    %c0_i32_0 = arith.constant 0 : i32
    %c0_i32_1 = arith.constant 0 : i32
    return %c0_i32, %c0_i32_0 : i32, i32
  }
  func.func @transform_7(%arg0: i32) -> (i32, i32) {
    %c0_i32 = arith.constant 0 : i32
    %c0_i32_0 = arith.constant 0 : i32
    return %arg0, %c0_i32 : i32, i32
  }
}

</mosaic_0001>

<llo_original>
// kernel: tpu_custom_call.1
$region0: #{tpu_custom_call.1}
  #allocation0 [shape = 'u32[]', space=smem, size = 0x4, offset = 0x4, fixed_abs, tag = 'smem constant byte address 0x4 - core index']
  #allocation1 [shape = 'u32[144,128]{1,0:T(1,128)}', space=vmem, size = 0x12000, scoped, tag = 'internal scratch']
  %s0 = inlined_call_operand.hbm [shape: f32[16,64], index: 0, kind: input, shape index: {}]
  %s1 = inlined_call_operand.hbm [shape: f32[64,256], index: 1, kind: input, shape index: {}]
  %s2 = inlined_call_operand.vmem [shape: f32[1,256], index: 2, kind: input, shape index: {}]
  %s3 = inlined_call_operand.hbm [shape: f32[256,128], index: 3, kind: input, shape index: {}]
  %s4 = inlined_call_operand.vmem [shape: f32[1,128], index: 4, kind: input, shape index: {}]
  %s5 = inlined_call_operand.hbm [shape: f32[128,128], index: 5, kind: input, shape index: {}]
  %s6 = inlined_call_operand.vmem [shape: f32[1,128], index: 6, kind: input, shape index: {}]
  %s7 = inlined_call_operand.hbm [shape: f32[16,128], index: 7, kind: output, shape index: {}]
  %s8 = sld [smem:[#allocation0]]
  $region54: #{tpu_custom_call.1} parent=0
    _
  %s10 = ssub.s32 1, %s8
  %s11 = scalar_select 0, %s10, %s8
  $region1: #{tpu_custom_call.1} parent=0
    #allocation2 [shape = 'u8[8192]{0}', space=vmem, size = 0x2000, scoped, tag = 'input window, operand 0, single buffered']
    #allocation3 [shape = 's32[1]{0}', space=sflag, size = 0x4, scoped, tag = 'scoped memory for tpu_custom_call.1']
    #allocation4 [shape = 's32[1]{0}', space=sflag, size = 0x4, scoped, tag = 'scoped memory for tpu_custom_call.1']
    #allocation5 [shape = 'u8[65536]{0}', space=vmem, size = 0x10000, scoped, tag = 'input window, operand 1, single buffered']
    #allocation6 [shape = 's32[1]{0}', space=sflag, size = 0x4, scoped, tag = 'scoped memory for tpu_custom_call.1']
    #allocation7 [shape = 'u8[131072]{0}', space=vmem, size = 0x20000, scoped, tag = 'input window, operand 3, single buffered']
    #allocation8 [shape = 'u8[65536]{0}', space=vmem, size = 0x10000, scoped, tag = 'input window, operand 5, single buffered']
    #allocation9 [shape = 's32[1]{0}', space=sflag, size = 0x4, scoped, tag = 'scoped memory for tpu_custom_call.1']
    #allocation10 [shape = 'u8[8192]{0}', space=vmem, size = 0x2000, scoped, tag = 'output window, operand 0, single buffered']
    %12 = vsyncpa [#allocation3], 0
    %13 = vsyncpa [#allocation6], 0
    %14 = vsyncpa [#allocation9], 0
    %15 = vsyncpa [#allocation4], 0
    // Predicated region
    $region2: #{tpu_custom_call.1} parent=1 // pred_check
      _
    $region3: #{tpu_custom_call.1} parent=1 // pred_check_branch
      %17 = sbr.rel (0) target = $region5
    $region4: #{tpu_custom_call.1} parent=1 // pred_region
      %s19 = ssub.s32 256, 256
      %20 = vsyncadd [#allocation3], %s19
      %s21 = sshll.u32 [#allocation2], 4
      %s22 = int_to_ptr.vmem [resolvable:$true] %s21
      %27 = dma.hbm_to_vmem [thread:$0]  %s0, 256, %s22, [#allocation3], 128, 128, 8
    $region5: #{tpu_custom_call.1} parent=1 // pred_fallthru
      _
    // Predicated region
    $region6: #{tpu_custom_call.1} parent=1 // pred_check
      _
    $region7: #{tpu_custom_call.1} parent=1 // pred_check_branch
      %29 = sbr.rel (0) target = $region9
    $region8: #{tpu_custom_call.1} parent=1 // pred_region
      %s31 = ssub.s32 2048, 2048
      %32 = vsyncadd [#allocation6], %s31
      %s33 = sshll.u32 [#allocation5], 4
      %s34 = int_to_ptr.vmem [resolvable:$true] %s33
      %39 = dma.hbm_to_vmem [thread:$0]  %s1, 2048, %s34, [#allocation6], 256, 256, 16
    $region9: #{tpu_custom_call.1} parent=1 // pred_fallthru
      _
    // Predicated region
    $region10: #{tpu_custom_call.1} parent=1 // pred_check
      _
    $region11: #{tpu_custom_call.1} parent=1 // pred_check_branch
      %41 = sbr.rel (0) target = $region13
    $region12: #{tpu_custom_call.1} parent=1 // pred_region
      _
    $region13: #{tpu_custom_call.1} parent=1 // pred_fallthru
      _
    // Predicated region
    $region14: #{tpu_custom_call.1} parent=1 // pred_check
      _
    $region15: #{tpu_custom_call.1} parent=1 // pred_check_branch
      %43 = sbr.rel (0) target = $region17
    $region16: #{tpu_custom_call.1} parent=1 // pred_region
      %s45 = ssub.s32 4096, 4096
      %46 = vsyncadd [#allocation6], %s45
      %s47 = sshll.u32 [#allocation7], 4
      %s48 = int_to_ptr.vmem [resolvable:$true] %s47
      %53 = dma.hbm_to_vmem [thread:$0]  %s3, 4096, %s48, [#allocation6], 128, 128, 8
    $region17: #{tpu_custom_call.1} parent=1 // pred_fallthru
      _
    // Predicated region
    $region18: #{tpu_custom_call.1} parent=1 // pred_check
      _
    $region19: #{tpu_custom_call.1} parent=1 // pred_check_branch
      %55 = sbr.rel (0) target = $region21
    $region20: #{tpu_custom_call.1} parent=1 // pred_region
      _
    $region21: #{tpu_custom_call.1} parent=1 // pred_fallthru
      _
    // Predicated region
    $region22: #{tpu_custom_call.1} parent=1 // pred_check
      _
    $region23: #{tpu_custom_call.1} parent=1 // pred_check_branch
      %57 = sbr.rel (0) target = $region25
    $region24: #{tpu_custom_call.1} parent=1 // pred_region
      %s59 = ssub.s32 2048, 2048
      %60 = vsyncadd [#allocation9], %s59
      %s61 = sshll.u32 [#allocation8], 4
      %s62 = int_to_ptr.vmem [resolvable:$true] %s61
      %67 = dma.hbm_to_vmem [thread:$0]  %s5, 2048, %s62, [#allocation9], 128, 128, 8
    $region25: #{tpu_custom_call.1} parent=1 // pred_fallthru
      _
    // Predicated region
    $region26: #{tpu_custom_call.1} parent=1 // pred_check
      _
    $region27: #{tpu_custom_call.1} parent=1 // pred_check_branch
      %69 = sbr.rel (0) target = $region29
    $region28: #{tpu_custom_call.1} parent=1 // pred_region
      _
    $region29: #{tpu_custom_call.1} parent=1 // pred_fallthru
      _
    // Predicated region
    $region30: #{tpu_custom_call.1} parent=1 // pred_check
      _
    $region31: #{tpu_custom_call.1} parent=1 // pred_check_branch
      %71 = sbr.rel (0) target = $region33
    $region32: #{tpu_custom_call.1} parent=1 // pred_region
      %72 = dma.done [#allocation3], 256
    $region33: #{tpu_custom_call.1} parent=1 // pred_fallthru
      _
    // Predicated region
    $region34: #{tpu_custom_call.1} parent=1 // pred_check
      _
    $region35: #{tpu_custom_call.1} parent=1 // pred_check_branch
      %74 = sbr.rel (0) target = $region37
    $region36: #{tpu_custom_call.1} parent=1 // pred_region
      %75 = dma.done [#allocation6], 2048
    $region37: #{tpu_custom_call.1} parent=1 // pred_fallthru
      _
    // Predicated region
    $region38: #{tpu_custom_call.1} parent=1 // pred_check
      _
    $region39: #{tpu_custom_call.1} parent=1 // pred_check_branch
      %77 = sbr.rel (0) target = $region41
    $region40: #{tpu_custom_call.1} parent=1 // pred_region
      %78 = dma.done [#allocation6], 4096
    $region41: #{tpu_custom_call.1} parent=1 // pred_fallthru
      _
    // Predicated region
    $region42: #{tpu_custom_call.1} parent=1 // pred_check
      _
    $region43: #{tpu_custom_call.1} parent=1 // pred_check_branch
      %80 = sbr.rel (0) target = $region45
    $region44: #{tpu_custom_call.1} parent=1 // pred_region
      %81 = dma.done [#allocation9], 2048
    $region45: #{tpu_custom_call.1} parent=1 // pred_fallthru
      _
    %v82 = vld [vmem:[#allocation2] sm:$0xff]
    %v83 = vld [vmem:[#allocation2 + $0x8] sm:$0xff]
    %v84 = vld [vmem:[#allocation5] sm:$0xff]
    %v85 = vld [vmem:[#allocation5 + $0x8] sm:$0xff]
    %v86 = vld [vmem:[#allocation5 + $0x10] sm:$0xff]
    %v87 = vld [vmem:[#allocation5 + $0x18] sm:$0xff]
    %v88 = vld [vmem:[#allocation5 + $0x20] sm:$0xff]
    %v89 = vld [vmem:[#allocation5 + $0x28] sm:$0xff]
    %v90 = vld [vmem:[#allocation5 + $0x30] sm:$0xff]
    %v91 = vld [vmem:[#allocation5 + $0x38] sm:$0xff]
    %v92 = vld [vmem:[#allocation5 + $0x40] sm:$0xff]
    %v93 = vld [vmem:[#allocation5 + $0x48] sm:$0xff]
    %v94 = vld [vmem:[#allocation5 + $0x50] sm:$0xff]
    %v95 = vld [vmem:[#allocation5 + $0x58] sm:$0xff]
    %v96 = vld [vmem:[#allocation5 + $0x60] sm:$0xff]
    %v97 = vld [vmem:[#allocation5 + $0x68] sm:$0xff]
    %v98 = vld [vmem:[#allocation5 + $0x70] sm:$0xff]
    %v99 = vld [vmem:[#allocation5 + $0x78] sm:$0xff]
    %v100 = vld [vmem:[%s2] sm:$0x3]
    %v102 = vlaneseq
    %v103 = vshrl.u32 %v102, 7
    %v104 = vsub.s32 0, %v103
    %v105 = vrot.slane %v100, %v104
    %v106 = vlaneseq
    %v107 = vshrl.u32 %v106, 7
    %v108 = vsub.s32 1, %v107
    %v109 = vrot.slane %v100, %v108
    %vm112 = vcmask 523264
    %v114 = vsel %vm112, %v82, 0
    %v117 = vsel %vm112, %v83, 0
    %119 = vmatprep.subr.mxu0 %v85
    %120 = vmatpush1.msra.mxu0 %v84
    %121 = vmatprep.subr.mxu0 %v87
    %122 = vmatpush1.msra.mxu0 %v86
    %123 = vmatprep.subr.mxu0 %v89
    %124 = vmatpush1.msra.mxu0 %v88
    %125 = vmatprep.subr.mxu0 %v91
    %126 = vmatpush1.msra.mxu0 %v90
    %127 = vmatprep.subr.mxu0 %v93
    %128 = vmatpush1.msra.mxu0 %v92
    %129 = vmatprep.subr.mxu0 %v95
    %130 = vmatpush1.msra.mxu0 %v94
    %131 = vmatprep.subr.mxu0 %v97
    %132 = vmatpush1.msra.mxu0 %v96
    %133 = vmatprep.subr.mxu0 %v99
    %134 = vmatpush1.msra.mxu0 %v98
    %135 = vmatprep.subr.mxu0 0.0
    %136 = vmatpush1.msra.mxu0 0.0
    %137 = vmatprep.subr.mxu0 0.0
    %138 = vmatpush1.msra.mxu0 0.0
    %139 = vmatprep.subr.mxu0 0.0
    %140 = vmatpush1.msra.mxu0 0.0
    %141 = vmatprep.subr.mxu0 0.0
    %142 = vmatpush1.msra.mxu0 0.0
    %143 = vmatprep.subr.mxu0 0.0
    %144 = vmatpush1.msra.mxu0 0.0
    %145 = vmatprep.subr.mxu0 0.0
    %146 = vmatpush1.msra.mxu0 0.0
    %147 = vmatprep.subr.mxu0 0.0
    %148 = vmatpush1.msra.mxu0 0.0
    %149 = vmatprep.subr.mxu0 0.0
    %150 = vmatpush1.msra.mxu0 0.0
    %151 = vmatprep.subr.mxu0 0.0
    %152 = vmatpush1.msra.mxu0 0.0
    %153 = vmatprep.subr.mxu0 0.0
    %154 = vmatpush1.msra.mxu0 0.0
    %155 = vmatprep.subr.mxu0 0.0
    %156 = vmatpush1.msra.mxu0 0.0
    %157 = vmatprep.subr.mxu0 0.0
    %158 = vmatpush1.msra.mxu0 0.0
    %159 = vmatprep.subr.mxu0 0.0
    %160 = vmatpush1.msra.mxu0 0.0
    %161 = vmatprep.subr.mxu0 0.0
    %162 = vmatpush1.msra.mxu0 0.0
    %163 = vmatprep.subr.mxu0 0.0
    %164 = vmatpush1.msra.mxu0 0.0
    %165 = vmatprep.subr.mxu0 0.0
    %166 = vmatpush1.msra.mxu0 0.0
    %167 = vmatprep.subr.mxu0 0.0
    %168 = vmatpush1.msra.mxu0 0.0
    %169 = vmatprep.subr.mxu0 0.0
    %170 = vmatpush1.msra.mxu0 0.0
    %171 = vmatprep.subr.mxu0 0.0
    %172 = vmatpush1.msra.mxu0 0.0
    %173 = vmatprep.subr.mxu0 0.0
    %174 = vmatpush1.msra.mxu0 0.0
    %175 = vmatprep.subr.mxu0 0.0
    %176 = vmatpush1.msra.mxu0 0.0
    %177 = vmatprep.subr.mxu0 0.0
    %178 = vmatpush1.msra.mxu0 0.0
    %179 = vmatprep.subr.mxu0 0.0
    %180 = vmatpush1.msra.mxu0 0.0
    %181 = vmatprep.subr.mxu0 0.0
    %182 = vmatpush1.msra.mxu0 0.0
    %183 = vmatprep.mubr.f32.mxu0 0.0
    %184 = vmatmul.mubr.f32.gmra.mrb[0].mxu0 %v114
    %v185 = vpop.f32.mrb[0].mxu0
    %v186 = vadd.f32 %v105, %v185
    %v187 = vpop.f32.mrb[0].mxu0
    %v188 = vadd.f32 %v109, %v187
    %189 = vmatprep.mubr.f32.mxu0 0.0
    %190 = vmatmul.mubr.f32.gmra.mrb[0].mxu0 %v117
    %v191 = vpop.f32.mrb[0].mxu0
    %v192 = vadd.f32 %v105, %v191
    %v193 = vpop.f32.mrb[0].mxu0
    %v194 = vadd.f32 %v109, %v193
    %195 = vdwg.mxu0
    %v196 = vmax.f32 %v186, 0.0
    %v197 = vmax.f32 %v188, 0.0
    %v198 = vmax.f32 %v192, 0.0
    %v199 = vmax.f32 %v194, 0.0
    %v200 = vld [vmem:[#allocation7] sm:$0xff]
    %v201 = vld [vmem:[#allocation7 + $0x8] sm:$0xff]
    %v202 = vld [vmem:[#allocation7 + $0x10] sm:$0xff]
    %v203 = vld [vmem:[#allocation7 + $0x18] sm:$0xff]
    %v204 = vld [vmem:[#allocation7 + $0x20] sm:$0xff]
    %v205 = vld [vmem:[#allocation7 + $0x28] sm:$0xff]
    %v206 = vld [vmem:[#allocation7 + $0x30] sm:$0xff]
    %v207 = vld [vmem:[#allocation7 + $0x38] sm:$0xff]
    %v208 = vld [vmem:[#allocation7 + $0x40] sm:$0xff]
    %v209 = vld [vmem:[#allocation7 + $0x48] sm:$0xff]
    %v210 = vld [vmem:[#allocation7 + $0x50] sm:$0xff]
    %v211 = vld [vmem:[#allocation7 + $0x58] sm:$0xff]
    %v212 = vld [vmem:[#allocation7 + $0x60] sm:$0xff]
    %v213 = vld [vmem:[#allocation7 + $0x68] sm:$0xff]
    %v214 = vld [vmem:[#allocation7 + $0x70] sm:$0xff]
    %v215 = vld [vmem:[#allocation7 + $0x78] sm:$0xff]
    %v216 = vld [vmem:[#allocation7 + $0x80] sm:$0xff]
    %v217 = vld [vmem:[#allocation7 + $0x88] sm:$0xff]
    %v218 = vld [vmem:[#allocation7 + $0x90] sm:$0xff]
    %v219 = vld [vmem:[#allocation7 + $0x98] sm:$0xff]
    %v220 = vld [vmem:[#allocation7 + $0xa0] sm:$0xff]
    %v221 = vld [vmem:[#allocation7 + $0xa8] sm:$0xff]
    %v222 = vld [vmem:[#allocation7 + $0xb0] sm:$0xff]
    %v223 = vld [vmem:[#allocation7 + $0xb8] sm:$0xff]
    %v224 = vld [vmem:[#allocation7 + $0xc0] sm:$0xff]
    %v225 = vld [vmem:[#allocation7 + $0xc8] sm:$0xff]
    %v226 = vld [vmem:[#allocation7 + $0xd0] sm:$0xff]
    %v227 = vld [vmem:[#allocation7 + $0xd8] sm:$0xff]
    %v228 = vld [vmem:[#allocation7 + $0xe0] sm:$0xff]
    %v229 = vld [vmem:[#allocation7 + $0xe8] sm:$0xff]
    %v230 = vld [vmem:[#allocation7 + $0xf0] sm:$0xff]
    %v231 = vld [vmem:[#allocation7 + $0xf8] sm:$0xff]
    %v232 = vld [vmem:[%s4] sm:$0x1]
    %v234 = vlaneseq
    %v235 = vshrl.u32 %v234, 7
    %v236 = vsub.s32 0, %v235
    %v237 = vrot.slane %v232, %v236
    %239 = vmatprep.subr.mxu0 0.0
    %240 = vmatpush1.msra.mxu0 %v200
    %241 = vmatprep.subr.mxu0 0.0
    %242 = vmatpush1.msra.mxu0 %v201
    %243 = vmatprep.subr.mxu0 0.0
    %244 = vmatpush1.msra.mxu0 %v202
    %245 = vmatprep.subr.mxu0 0.0
    %246 = vmatpush1.msra.mxu0 %v203
    %247 = vmatprep.subr.mxu0 0.0
    %248 = vmatpush1.msra.mxu0 %v204
    %249 = vmatprep.subr.mxu0 0.0
    %250 = vmatpush1.msra.mxu0 %v205
    %251 = vmatprep.subr.mxu0 0.0
    %252 = vmatpush1.msra.mxu0 %v206
    %253 = vmatprep.subr.mxu0 0.0
    %254 = vmatpush1.msra.mxu0 %v207
    %255 = vmatprep.subr.mxu0 0.0
    %256 = vmatpush1.msra.mxu0 %v208
    %257 = vmatprep.subr.mxu0 0.0
    %258 = vmatpush1.msra.mxu0 %v209
    %259 = vmatprep.subr.mxu0 0.0
    %260 = vmatpush1.msra.mxu0 %v210
    %261 = vmatprep.subr.mxu0 0.0
    %262 = vmatpush1.msra.mxu0 %v211
    %263 = vmatprep.subr.mxu0 0.0
    %264 = vmatpush1.msra.mxu0 %v212
    %265 = vmatprep.subr.mxu0 0.0
    %266 = vmatpush1.msra.mxu0 %v213
    %267 = vmatprep.subr.mxu0 0.0
    %268 = vmatpush1.msra.mxu0 %v214
    %269 = vmatprep.subr.mxu0 0.0
    %270 = vmatpush1.msra.mxu0 %v215
    %271 = vmatprep.subr.mxu0 0.0
    %272 = vmatpush1.msra.mxu0 %v216
    %273 = vmatprep.subr.mxu0 0.0
    %274 = vmatpush1.msra.mxu0 %v217
    %275 = vmatprep.subr.mxu0 0.0
    %276 = vmatpush1.msra.mxu0 %v218
    %277 = vmatprep.subr.mxu0 0.0
    %278 = vmatpush1.msra.mxu0 %v219
    %279 = vmatprep.subr.mxu0 0.0
    %280 = vmatpush1.msra.mxu0 %v220
    %281 = vmatprep.subr.mxu0 0.0
    %282 = vmatpush1.msra.mxu0 %v221
    %283 = vmatprep.subr.mxu0 0.0
    %284 = vmatpush1.msra.mxu0 %v222
    %285 = vmatprep.subr.mxu0 0.0
    %286 = vmatpush1.msra.mxu0 %v223
    %287 = vmatprep.subr.mxu0 0.0
    %288 = vmatpush1.msra.mxu0 %v224
    %289 = vmatprep.subr.mxu0 0.0
    %290 = vmatpush1.msra.mxu0 %v225
    %291 = vmatprep.subr.mxu0 0.0
    %292 = vmatpush1.msra.mxu0 %v226
    %293 = vmatprep.subr.mxu0 0.0
    %294 = vmatpush1.msra.mxu0 %v227
    %295 = vmatprep.subr.mxu0 0.0
    %296 = vmatpush1.msra.mxu0 %v228
    %297 = vmatprep.subr.mxu0 0.0
    %298 = vmatpush1.msra.mxu0 %v229
    %299 = vmatprep.subr.mxu0 0.0
    %300 = vmatpush1.msra.mxu0 %v230
    %301 = vmatprep.subr.mxu0 0.0
    %302 = vmatpush1.msra.mxu0 %v231
    %303 = vmatprep.mubr.f32.mxu0 %v197
    %304 = vmatmul.mubr.f32.gmra.mrb[0].mxu0 %v196
    %v305 = vpop.f32.mrb[0].mxu0
    %v306 = vadd.f32 %v237, %v305
    %v307 = vpop.f32.mrb[0].mxu0
    %308 = vmatprep.mubr.f32.mxu0 %v199
    %309 = vmatmul.mubr.f32.gmra.mrb[0].mxu0 %v198
    %v310 = vpop.f32.mrb[0].mxu0
    %v311 = vadd.f32 %v237, %v310
    %v312 = vpop.f32.mrb[0].mxu0
    %313 = vdwg.mxu0
    %v314 = vmax.f32 %v306, 0.0
    %v315 = vmax.f32 %v311, 0.0
    %v316 = vld [vmem:[#allocation8] sm:$0xff]
    %v317 = vld [vmem:[#allocation8 + $0x8] sm:$0xff]
    %v318 = vld [vmem:[#allocation8 + $0x10] sm:$0xff]
    %v319 = vld [vmem:[#allocation8 + $0x18] sm:$0xff]
    %v320 = vld [vmem:[#allocation8 + $0x20] sm:$0xff]
    %v321 = vld [vmem:[#allocation8 + $0x28] sm:$0xff]
    %v322 = vld [vmem:[#allocation8 + $0x30] sm:$0xff]
    %v323 = vld [vmem:[#allocation8 + $0x38] sm:$0xff]
    %v324 = vld [vmem:[#allocation8 + $0x40] sm:$0xff]
    %v325 = vld [vmem:[#allocation8 + $0x48] sm:$0xff]
    %v326 = vld [vmem:[#allocation8 + $0x50] sm:$0xff]
    %v327 = vld [vmem:[#allocation8 + $0x58] sm:$0xff]
    %v328 = vld [vmem:[#allocation8 + $0x60] sm:$0xff]
    %v329 = vld [vmem:[#allocation8 + $0x68] sm:$0xff]
    %v330 = vld [vmem:[#allocation8 + $0x70] sm:$0xff]
    %v331 = vld [vmem:[#allocation8 + $0x78] sm:$0xff]
    %v332 = vld [vmem:[%s6] sm:$0x1]
    %v334 = vlaneseq
    %v335 = vshrl.u32 %v334, 7
    %v336 = vsub.s32 0, %v335
    %v337 = vrot.slane %v332, %v336
    %339 = vmatprep.subr.mxu0 0.0
    %340 = vmatpush1.msra.mxu0 %v316
    %341 = vmatprep.subr.mxu0 0.0
    %342 = vmatpush1.msra.mxu0 %v317
    %343 = vmatprep.subr.mxu0 0.0
    %344 = vmatpush1.msra.mxu0 %v318
    %345 = vmatprep.subr.mxu0 0.0
    %346 = vmatpush1.msra.mxu0 %v319
    %347 = vmatprep.subr.mxu0 0.0
    %348 = vmatpush1.msra.mxu0 %v320
    %349 = vmatprep.subr.mxu0 0.0
    %350 = vmatpush1.msra.mxu0 %v321
    %351 = vmatprep.subr.mxu0 0.0
    %352 = vmatpush1.msra.mxu0 %v322
    %353 = vmatprep.subr.mxu0 0.0
    %354 = vmatpush1.msra.mxu0 %v323
    %355 = vmatprep.subr.mxu0 0.0
    %356 = vmatpush1.msra.mxu0 %v324
    %357 = vmatprep.subr.mxu0 0.0
    %358 = vmatpush1.msra.mxu0 %v325
    %359 = vmatprep.subr.mxu0 0.0
    %360 = vmatpush1.msra.mxu0 %v326
    %361 = vmatprep.subr.mxu0 0.0
    %362 = vmatpush1.msra.mxu0 %v327
    %363 = vmatprep.subr.mxu0 0.0
    %364 = vmatpush1.msra.mxu0 %v328
    %365 = vmatprep.subr.mxu0 0.0
    %366 = vmatpush1.msra.mxu0 %v329
    %367 = vmatprep.subr.mxu0 0.0
    %368 = vmatpush1.msra.mxu0 %v330
    %369 = vmatprep.subr.mxu0 0.0
    %370 = vmatpush1.msra.mxu0 %v331
    %371 = vmatprep.subr.mxu0 0.0
    %372 = vmatpush1.msra.mxu0 0.0
    %373 = vmatprep.subr.mxu0 0.0
    %374 = vmatpush1.msra.mxu0 0.0
    %375 = vmatprep.subr.mxu0 0.0
    %376 = vmatpush1.msra.mxu0 0.0
    %377 = vmatprep.subr.mxu0 0.0
    %378 = vmatpush1.msra.mxu0 0.0
    %379 = vmatprep.subr.mxu0 0.0
    %380 = vmatpush1.msra.mxu0 0.0
    %381 = vmatprep.subr.mxu0 0.0
    %382 = vmatpush1.msra.mxu0 0.0
    %383 = vmatprep.subr.mxu0 0.0
    %384 = vmatpush1.msra.mxu0 0.0
    %385 = vmatprep.subr.mxu0 0.0
    %386 = vmatpush1.msra.mxu0 0.0
    %387 = vmatprep.subr.mxu0 0.0
    %388 = vmatpush1.msra.mxu0 0.0
    %389 = vmatprep.subr.mxu0 0.0
    %390 = vmatpush1.msra.mxu0 0.0
    %391 = vmatprep.subr.mxu0 0.0
    %392 = vmatpush1.msra.mxu0 0.0
    %393 = vmatprep.subr.mxu0 0.0
    %394 = vmatpush1.msra.mxu0 0.0
    %395 = vmatprep.subr.mxu0 0.0
    %396 = vmatpush1.msra.mxu0 0.0
    %397 = vmatprep.subr.mxu0 0.0
    %398 = vmatpush1.msra.mxu0 0.0
    %399 = vmatprep.subr.mxu0 0.0
    %400 = vmatpush1.msra.mxu0 0.0
    %401 = vmatprep.subr.mxu0 0.0
    %402 = vmatpush1.msra.mxu0 0.0
    %403 = vmatprep.mubr.f32.mxu0 0.0
    %404 = vmatmul.mubr.f32.gmra.mrb[0].mxu0 %v314
    %v405 = vpop.f32.mrb[0].mxu0
    %v406 = vadd.f32 %v337, %v405
    %v407 = vpop.f32.mrb[0].mxu0
    %408 = vmatprep.mubr.f32.mxu0 0.0
    %409 = vmatmul.mubr.f32.gmra.mrb[0].mxu0 %v315
    %v410 = vpop.f32.mrb[0].mxu0
    %v411 = vadd.f32 %v337, %v410
    %v412 = vpop.f32.mrb[0].mxu0
    %413 = vdwg.mxu0
    %414 = vst [vmem:[#allocation10] sm:$0xff] %v406
    %415 = vst [vmem:[#allocation10 + $0x8] sm:$0xff] %v411
    // Predicated region
    $region46: #{tpu_custom_call.1} parent=1 // pred_check
      _
    $region47: #{tpu_custom_call.1} parent=1 // pred_check_branch
      %417 = sbr.rel (0) target = $region49
    $region48: #{tpu_custom_call.1} parent=1 // pred_region
      %s419 = ssub.s32 256, 256
      %420 = vsyncadd [#allocation4], %s419
      %s421 = sshll.u32 [#allocation10], 4
      %s422 = int_to_ptr.vmem [resolvable:$true] %s421
      %427 = dma.vmem_to_hbm [thread:$0]  %s422, 256, %s7, [#allocation4], 128, 128, 8
    $region49: #{tpu_custom_call.1} parent=1 // pred_fallthru
      _
    // Predicated region
    $region50: #{tpu_custom_call.1} parent=1 // pred_check
      _
    $region51: #{tpu_custom_call.1} parent=1 // pred_check_branch
      %429 = sbr.rel (0) target = $region53
    $region52: #{tpu_custom_call.1} parent=1 // pred_region
      %430 = dma.done [#allocation4], 256
    $region53: #{tpu_custom_call.1} parent=1 // pred_fallthru
      _
    %431 = vsyncpa [#allocation3], 1
    %432 = vsyncpa [#allocation6], 1
    %433 = vsyncpa [#allocation9], 1
    %434 = vsyncpa [#allocation4], 1

</llo_original>
